<compile_context>
chip_gen: v6e
topology: v6e:2x2x1
jax: 0.10.0
libtpu: 0.0.40
codegen_flags: <defaults>
</compile_context>

<pallas_src>
import jax
import jax.numpy as jnp
from jax.experimental import pallas as pl
from jax.experimental.pallas import tpu as pltpu


# ---------------------------------------------------------------------------
# Kernel body (shared by every calling convention below).
# ---------------------------------------------------------------------------
def _relu_conv1x1_kernel(x_ref, w_ref, o_ref):
    # x_ref: (Cin, P)        NCHW-native activation tile
    # w_ref: (Cout_blk, Cin) weight tile
    # o_ref: (Cout_blk, P)   NCHW-native output tile
    x = jnp.maximum(x_ref[...], 0.0)                       # fused ReLU (VPU)
    if w_ref.dtype != x.dtype:                              # bf16-weight path
        x = x.astype(w_ref.dtype)
    o_ref[...] = jnp.dot(                                   # 1x1 conv == matmul (MXU)
        w_ref[...], x, preferred_element_type=jnp.float32
    ).astype(o_ref.dtype)


def _cost(cin, p, cout, x_dtype, w_dtype, n=1):
    return pl.CostEstimate(
        flops=2 * n * p * cin * cout,
        transcendentals=0,
        bytes_accessed=(n * jnp.dtype(x_dtype).itemsize * cin * p
                        + jnp.dtype(w_dtype).itemsize * cout * cin
                        + n * 4 * cout * p),
    )


def _tensorcores_per_chip():
    """Best-effort chip detection; only v7x gets the 2-way Cout split."""
    try:
        kind = jax.devices()[0].device_kind.lower()
    except Exception:
        return 1
    return 2 if ("v7" in kind or "7x" in kind) else 1


# ---------------------------------------------------------------------------
# Calling conventions.
# ---------------------------------------------------------------------------
def _call_gridless(x_cp, w_mat, out_dtype):
    """Single-TC (v5e / v6e): whole problem lives in VMEM, no grid scaffolding."""
    cin, p = x_cp.shape
    cout = w_mat.shape[0]
    return pl.pallas_call(
        _relu_conv1x1_kernel,
        out_shape=jax.ShapeDtypeStruct((cout, p), out_dtype),
        in_specs=[
            pl.BlockSpec(memory_space=pltpu.MemorySpace.VMEM),
            pl.BlockSpec(memory_space=pltpu.MemorySpace.VMEM),
        ],
        out_specs=pl.BlockSpec(memory_space=pltpu.MemorySpace.VMEM),
        cost_estimate=_cost(cin, p, cout, x_cp.dtype, w_mat.dtype),
    )(x_cp, w_mat)


def _call_cout_split(x_cp, w_mat, out_dtype, n_split):
    """v7x: 2-way parallel grid over Cout so both TensorCores share the weight DMA."""
    cin, p = x_cp.shape
    cout = w_mat.shape[0]
    blk = ((pl.cdiv(cout, n_split) + 7) // 8) * 8          # sublane-aligned block
    grid = (pl.cdiv(cout, blk),)
    return pl.pallas_call(
        _relu_conv1x1_kernel,
        out_shape=jax.ShapeDtypeStruct((cout, p), out_dtype),
        grid_spec=pltpu.PrefetchScalarGridSpec(
            num_scalar_prefetch=0,
            grid=grid,
            in_specs=[
                pl.BlockSpec((cin, p), lambda i: (0, 0)),    # full activation
                pl.BlockSpec((blk, cin), lambda i: (i, 0)),  # half the weight
            ],
            out_specs=pl.BlockSpec((blk, p), lambda i: (i, 0)),
        ),
        compiler_params=pltpu.CompilerParams(dimension_semantics=("parallel",)),
        cost_estimate=_cost(cin, p, cout, x_cp.dtype, w_mat.dtype),
    )(x_cp, w_mat)


def _call_batched(x_ncp, w_mat, out_dtype, n_cout_blocks):
    """N>1 fallback: batch grid axis, weight stays resident in VMEM across batch."""
    n, cin, p = x_ncp.shape
    cout = w_mat.shape[0]
    if n_cout_blocks > 1:
        blk = ((pl.cdiv(cout, n_cout_blocks) + 7) // 8) * 8
    else:
        blk = cout
    grid = (n, pl.cdiv(cout, blk))
    return pl.pallas_call(
        _relu_conv1x1_kernel,
        out_shape=jax.ShapeDtypeStruct((n, cout, p), out_dtype),
        grid_spec=pltpu.PrefetchScalarGridSpec(
            num_scalar_prefetch=0,
            grid=grid,
            in_specs=[
                pl.BlockSpec((None, cin, p), lambda b, i: (b, 0, 0)),
                pl.BlockSpec((blk, cin), lambda b, i: (i, 0)),
            ],
            out_specs=pl.BlockSpec((None, blk, p), lambda b, i: (b, i, 0)),
        ),
        compiler_params=pltpu.CompilerParams(
            dimension_semantics=("parallel", "parallel")),
        cost_estimate=_cost(cin, p, cout, x_ncp.dtype, w_mat.dtype, n=n),
    )(x_ncp, w_mat)


# ---------------------------------------------------------------------------
# Public entry point: matches PyTorch ReLU(inplace) -> Conv2d(1x1, bias=False).
# ---------------------------------------------------------------------------
def relu_conv2d_1x1(x_nchw, w_oihw, *, weights_in_bf16=False):
    """x_nchw: (N, C_in, H, W), w_oihw: (C_out, C_in, 1, 1) -> (N, C_out, H, W)."""
    n, cin, h, w = x_nchw.shape
    cout = w_oihw.shape[0]
    p = h * w
    out_dtype = x_nchw.dtype

    # glue-free reshape (no data movement): OIHW 1x1 -> (Cout, Cin)
    w_mat = w_oihw.reshape(cout, cin)
    if weights_in_bf16:
        # halves the dominant HBM traffic; ~1e-2 rel deviation from fp32 parity
        w_mat = w_mat.astype(jnp.bfloat16)

    n_tc = _tensorcores_per_chip()   # Python-level, resolved at trace time

    if n == 1:
        x_cp = x_nchw.reshape(cin, p)        # pure reshape for N=1, no transpose
        if n_tc >= 2:
            out = _call_cout_split(x_cp, w_mat, out_dtype, n_split=n_tc)
        else:
            out = _call_gridless(x_cp, w_mat, out_dtype)
        return out.reshape(1, cout, h, w)

    out = _call_batched(x_nchw.reshape(n, cin, p), w_mat, out_dtype,
                        n_cout_blocks=n_tc)
    return out.reshape(n, cout, h, w)


relu_conv2d_1x1 = jax.jit(relu_conv2d_1x1, static_argnames=("weights_in_bf16",))


if __name__ == "__main__":
    key = jax.random.PRNGKey(0)
    kx, kw = jax.random.split(key)

    # Shapes from the module: x218 = randn(1, 440, 7, 7); Conv2d(440, 440, 1x1, bias=False)
    x = jax.random.normal(kx, (1, 440, 7, 7), dtype=jnp.float32)
    bound = 1.0 / jnp.sqrt(440.0)
    w = jax.random.uniform(kw, (440, 440, 1, 1), dtype=jnp.float32,
                           minval=-bound, maxval=bound)

    out = jax.block_until_ready(relu_conv2d_1x1(x, w))

    # reference check in plain JAX (strict fp32 parity: bf16 path is off)
    ref = jnp.einsum("nchw,oc->nohw", jnp.maximum(x, 0.0), w.reshape(440, 440))
    assert out.shape == (1, 440, 7, 7)
    assert jnp.allclose(out, ref, atol=1e-4, rtol=1e-4)

    print("KERNEL_OK")
</pallas_src>

<mosaic_0001>
module attributes {stable_mosaic.version = 11 : i64} {
  func.func @_relu_conv1x1_kernel(%arg0: memref<440x49xf32, #tpu.memory_space<vmem>>, %arg1: memref<440x440xf32, #tpu.memory_space<vmem>>, %arg2: memref<440x49xf32, #tpu.memory_space<vmem>>) attributes {dimension_semantics = [], scalar_prefetch = 0 : i64, scratch_operands = 0 : i64, tpu.core_type = #tpu.core_type<tc>} {
    %c0 = arith.constant 0 : index
    %c0_0 = arith.constant 0 : index
    %0 = vector.load %arg0[%c0, %c0_0] : memref<440x49xf32, #tpu.memory_space<vmem>>, vector<440x49xf32>
    %cst = arith.constant 0.000000e+00 : f32
    %1 = vector.broadcast %cst : f32 to vector<440x49xf32>
    %2 = arith.maximumf %0, %1 : vector<440x49xf32>
    %c0_1 = arith.constant 0 : index
    %c0_2 = arith.constant 0 : index
    %3 = vector.load %arg1[%c0_1, %c0_2] : memref<440x440xf32, #tpu.memory_space<vmem>>, vector<440x440xf32>
    %cst_3 = arith.constant dense<0.000000e+00> : vector<440x49xf32>
    %4 = tpu.matmul %3, %2, %cst_3 {dimension_numbers = #tpu.dot_dimension_numbers<[1], [0], [0], [1], [0, 0, 1, 1], [], []>} : vector<440x440xf32>, vector<440x49xf32>, vector<440x49xf32> -> vector<440x49xf32>
    %c0_4 = arith.constant 0 : index
    %c0_5 = arith.constant 0 : index
    %5 = vector.load %arg2[%c0_4, %c0_5] : memref<440x49xf32, #tpu.memory_space<vmem>>, vector<440x49xf32>
    tpu.vector_store %arg2[%c0_4, %c0_5], %4 {strides = array<i32>} : memref<440x49xf32, #tpu.memory_space<vmem>>, vector<440x49xf32>,
    return
  }
}

</mosaic_0001>

<llo_original>
// kernel: relu_conv2d_1x1.1
$region0: #{relu_conv2d_1x1.1}
  #allocation0 [shape = 'u32[]', space=smem, size = 0x4, offset = 0x4, fixed_abs, tag = 'smem constant byte address 0x4 - core index']
  #allocation1 [shape = 'u32[144,128]{1,0:T(1,128)}', space=vmem, size = 0x12000, scoped, tag = 'internal scratch']
  %s0 = inlined_call_operand.vmem [shape: f32[440,49], index: 0, kind: input, shape index: {}]
  %s1 = inlined_call_operand.vmem [shape: f32[440,440], index: 1, kind: input, shape index: {}]
  %s2 = inlined_call_operand.vmem [shape: f32[440,49], index: 2, kind: output, shape index: {}]
  %s3 = sld [smem:[#allocation0]]
  $region18: #{relu_conv2d_1x1.1} parent=0
    _
  %s5 = ssub.s32 1, %s3
  %s6 = scalar_select 0, %s5, %s3
  // Predicated region
  $region2: #{relu_conv2d_1x1.1} parent=0 // pred_check
    _
  $region3: #{relu_conv2d_1x1.1} parent=0 // pred_check_branch
    %8 = sbr.rel (0) target = $region5
  $region4: #{relu_conv2d_1x1.1} parent=0 // pred_region
    _
  $region5: #{relu_conv2d_1x1.1} parent=0 // pred_fallthru
    _
  // Predicated region
  $region6: #{relu_conv2d_1x1.1} parent=0 // pred_check
    _
  $region7: #{relu_conv2d_1x1.1} parent=0 // pred_check_branch
    %10 = sbr.rel (0) target = $region9
  $region8: #{relu_conv2d_1x1.1} parent=0 // pred_region
    _
  $region9: #{relu_conv2d_1x1.1} parent=0 // pred_fallthru
    _
  %v11 = vld [vmem:[%s0] sm:$0xff]
  %v12 = vld [vmem:[%s0 + $0x8] sm:$0xff]
  %v13 = vld [vmem:[%s0 + $0x10] sm:$0xff]
  %v14 = vld [vmem:[%s0 + $0x18] sm:$0xff]
  %v15 = vld [vmem:[%s0 + $0x20] sm:$0xff]
  %v16 = vld [vmem:[%s0 + $0x28] sm:$0xff]
  %v17 = vld [vmem:[%s0 + $0x30] sm:$0xff]
  %v18 = vld [vmem:[%s0 + $0x38] sm:$0xff]
  %v19 = vld [vmem:[%s0 + $0x40] sm:$0xff]
  %v20 = vld [vmem:[%s0 + $0x48] sm:$0xff]
  %v21 = vld [vmem:[%s0 + $0x50] sm:$0xff]
  %v22 = vld [vmem:[%s0 + $0x58] sm:$0xff]
  %v23 = vld [vmem:[%s0 + $0x60] sm:$0xff]
  %v24 = vld [vmem:[%s0 + $0x68] sm:$0xff]
  %v25 = vld [vmem:[%s0 + $0x70] sm:$0xff]
  %v26 = vld [vmem:[%s0 + $0x78] sm:$0xff]
  %v27 = vld [vmem:[%s0 + $0x80] sm:$0xff]
  %v28 = vld [vmem:[%s0 + $0x88] sm:$0xff]
  %v29 = vld [vmem:[%s0 + $0x90] sm:$0xff]
  %v30 = vld [vmem:[%s0 + $0x98] sm:$0xff]
  %v31 = vld [vmem:[%s0 + $0xa0] sm:$0xff]
  %v32 = vld [vmem:[%s0 + $0xa8] sm:$0xff]
  %v33 = vld [vmem:[%s0 + $0xb0] sm:$0xff]
  %v34 = vld [vmem:[%s0 + $0xb8] sm:$0xff]
  %v35 = vld [vmem:[%s0 + $0xc0] sm:$0xff]
  %v36 = vld [vmem:[%s0 + $0xc8] sm:$0xff]
  %v37 = vld [vmem:[%s0 + $0xd0] sm:$0xff]
  %v38 = vld [vmem:[%s0 + $0xd8] sm:$0xff]
  %v39 = vld [vmem:[%s0 + $0xe0] sm:$0xff]
  %v40 = vld [vmem:[%s0 + $0xe8] sm:$0xff]
  %v41 = vld [vmem:[%s0 + $0xf0] sm:$0xff]
  %v42 = vld [vmem:[%s0 + $0xf8] sm:$0xff]
  %v43 = vld [vmem:[%s0 + $0x100] sm:$0xff]
  %v44 = vld [vmem:[%s0 + $0x108] sm:$0xff]
  %v45 = vld [vmem:[%s0 + $0x110] sm:$0xff]
  %v46 = vld [vmem:[%s0 + $0x118] sm:$0xff]
  %v47 = vld [vmem:[%s0 + $0x120] sm:$0xff]
  %v48 = vld [vmem:[%s0 + $0x128] sm:$0xff]
  %v49 = vld [vmem:[%s0 + $0x130] sm:$0xff]
  %v50 = vld [vmem:[%s0 + $0x138] sm:$0xff]
  %v51 = vld [vmem:[%s0 + $0x140] sm:$0xff]
  %v52 = vld [vmem:[%s0 + $0x148] sm:$0xff]
  %v53 = vld [vmem:[%s0 + $0x150] sm:$0xff]
  %v54 = vld [vmem:[%s0 + $0x158] sm:$0xff]
  %v55 = vld [vmem:[%s0 + $0x160] sm:$0xff]
  %v56 = vld [vmem:[%s0 + $0x168] sm:$0xff]
  %v57 = vld [vmem:[%s0 + $0x170] sm:$0xff]
  %v58 = vld [vmem:[%s0 + $0x178] sm:$0xff]
  %v59 = vld [vmem:[%s0 + $0x180] sm:$0xff]
  %v60 = vld [vmem:[%s0 + $0x188] sm:$0xff]
  %v61 = vld [vmem:[%s0 + $0x190] sm:$0xff]
  %v62 = vld [vmem:[%s0 + $0x198] sm:$0xff]
  %v63 = vld [vmem:[%s0 + $0x1a0] sm:$0xff]
  %v64 = vld [vmem:[%s0 + $0x1a8] sm:$0xff]
  %v65 = vld [vmem:[%s0 + $0x1b0] sm:$0xff]
  %v66 = vmax.f32 %v11, 0.0
  %v67 = vmax.f32 %v12, 0.0
  %v68 = vmax.f32 %v13, 0.0
  %v69 = vmax.f32 %v14, 0.0
  %v70 = vmax.f32 %v15, 0.0
  %v71 = vmax.f32 %v16, 0.0
  %v72 = vmax.f32 %v17, 0.0
  %v73 = vmax.f32 %v18, 0.0
  %v74 = vmax.f32 %v19, 0.0
  %v75 = vmax.f32 %v20, 0.0
  %v76 = vmax.f32 %v21, 0.0
  %v77 = vmax.f32 %v22, 0.0
  %v78 = vmax.f32 %v23, 0.0
  %v79 = vmax.f32 %v24, 0.0
  %v80 = vmax.f32 %v25, 0.0
  %v81 = vmax.f32 %v26, 0.0
  %v82 = vmax.f32 %v27, 0.0
  %v83 = vmax.f32 %v28, 0.0
  %v84 = vmax.f32 %v29, 0.0
  %v85 = vmax.f32 %v30, 0.0
  %v86 = vmax.f32 %v31, 0.0
  %v87 = vmax.f32 %v32, 0.0
  %v88 = vmax.f32 %v33, 0.0
  %v89 = vmax.f32 %v34, 0.0
  %v90 = vmax.f32 %v35, 0.0
  %v91 = vmax.f32 %v36, 0.0
  %v92 = vmax.f32 %v37, 0.0
  %v93 = vmax.f32 %v38, 0.0
  %v94 = vmax.f32 %v39, 0.0
  %v95 = vmax.f32 %v40, 0.0
  %v96 = vmax.f32 %v41, 0.0
  %v97 = vmax.f32 %v42, 0.0
  %v98 = vmax.f32 %v43, 0.0
  %v99 = vmax.f32 %v44, 0.0
  %v100 = vmax.f32 %v45, 0.0
  %v101 = vmax.f32 %v46, 0.0
  %v102 = vmax.f32 %v47, 0.0
  %v103 = vmax.f32 %v48, 0.0
  %v104 = vmax.f32 %v49, 0.0
  %v105 = vmax.f32 %v50, 0.0
  %v106 = vmax.f32 %v51, 0.0
  %v107 = vmax.f32 %v52, 0.0
  %v108 = vmax.f32 %v53, 0.0
  %v109 = vmax.f32 %v54, 0.0
  %v110 = vmax.f32 %v55, 0.0
  %v111 = vmax.f32 %v56, 0.0
  %v112 = vmax.f32 %v57, 0.0
  %v113 = vmax.f32 %v58, 0.0
  %v114 = vmax.f32 %v59, 0.0
  %v115 = vmax.f32 %v60, 0.0
  %v116 = vmax.f32 %v61, 0.0
  %v117 = vmax.f32 %v62, 0.0
  %v118 = vmax.f32 %v63, 0.0
  %v119 = vmax.f32 %v64, 0.0
  %v120 = vmax.f32 %v65, 0.0
  %v121 = vld [vmem:[%s1] sm:$0xff]
  %v122 = vld [vmem:[%s1 + $0x8] sm:$0xff]
  %v123 = vld [vmem:[%s1 + $0x10] sm:$0xff]
  %v124 = vld [vmem:[%s1 + $0x18] sm:$0xff]
  %v125 = vld [vmem:[%s1 + $0x20] sm:$0xff]
  %v126 = vld [vmem:[%s1 + $0x28] sm:$0xff]
  %v127 = vld [vmem:[%s1 + $0x30] sm:$0xff]
  %v128 = vld [vmem:[%s1 + $0x38] sm:$0xff]
  %v129 = vld [vmem:[%s1 + $0x40] sm:$0xff]
  %v130 = vld [vmem:[%s1 + $0x48] sm:$0xff]
  %v131 = vld [vmem:[%s1 + $0x50] sm:$0xff]
  %v132 = vld [vmem:[%s1 + $0x58] sm:$0xff]
  %v133 = vld [vmem:[%s1 + $0x60] sm:$0xff]
  %v134 = vld [vmem:[%s1 + $0x68] sm:$0xff]
  %v135 = vld [vmem:[%s1 + $0x70] sm:$0xff]
  %v136 = vld [vmem:[%s1 + $0x78] sm:$0xff]
  %v137 = vld [vmem:[%s1 + $0x80] sm:$0xff]
  %v138 = vld [vmem:[%s1 + $0x88] sm:$0xff]
  %v139 = vld [vmem:[%s1 + $0x90] sm:$0xff]
  %v140 = vld [vmem:[%s1 + $0x98] sm:$0xff]
  %v141 = vld [vmem:[%s1 + $0xa0] sm:$0xff]
  %v142 = vld [vmem:[%s1 + $0xa8] sm:$0xff]
  %v143 = vld [vmem:[%s1 + $0xb0] sm:$0xff]
  %v144 = vld [vmem:[%s1 + $0xb8] sm:$0xff]
  %v145 = vld [vmem:[%s1 + $0xc0] sm:$0xff]
  %v146 = vld [vmem:[%s1 + $0xc8] sm:$0xff]
  %v147 = vld [vmem:[%s1 + $0xd0] sm:$0xff]
  %v148 = vld [vmem:[%s1 + $0xd8] sm:$0xff]
  %v149 = vld [vmem:[%s1 + $0xe0] sm:$0xff]
  %v150 = vld [vmem:[%s1 + $0xe8] sm:$0xff]
  %v151 = vld [vmem:[%s1 + $0xf0] sm:$0xff]
  %v152 = vld [vmem:[%s1 + $0xf8] sm:$0xff]
  %v153 = vld [vmem:[%s1 + $0x100] sm:$0xff]
  %v154 = vld [vmem:[%s1 + $0x108] sm:$0xff]
  %v155 = vld [vmem:[%s1 + $0x110] sm:$0xff]
  %v156 = vld [vmem:[%s1 + $0x118] sm:$0xff]
  %v157 = vld [vmem:[%s1 + $0x120] sm:$0xff]
  %v158 = vld [vmem:[%s1 + $0x128] sm:$0xff]
  %v159 = vld [vmem:[%s1 + $0x130] sm:$0xff]
  %v160 = vld [vmem:[%s1 + $0x138] sm:$0xff]
  %v161 = vld [vmem:[%s1 + $0x140] sm:$0xff]
  %v162 = vld [vmem:[%s1 + $0x148] sm:$0xff]
  %v163 = vld [vmem:[%s1 + $0x150] sm:$0xff]
  %v164 = vld [vmem:[%s1 + $0x158] sm:$0xff]
  %v165 = vld [vmem:[%s1 + $0x160] sm:$0xff]
  %v166 = vld [vmem:[%s1 + $0x168] sm:$0xff]
  %v167 = vld [vmem:[%s1 + $0x170] sm:$0xff]
  %v168 = vld [vmem:[%s1 + $0x178] sm:$0xff]
  %v169 = vld [vmem:[%s1 + $0x180] sm:$0xff]
  %v170 = vld [vmem:[%s1 + $0x188] sm:$0xff]
  %v171 = vld [vmem:[%s1 + $0x190] sm:$0xff]
  %v172 = vld [vmem:[%s1 + $0x198] sm:$0xff]
  %v173 = vld [vmem:[%s1 + $0x1a0] sm:$0xff]
  %v174 = vld [vmem:[%s1 + $0x1a8] sm:$0xff]
  %v175 = vld [vmem:[%s1 + $0x1b0] sm:$0xff]
  %v176 = vld [vmem:[%s1 + $0x1b8] sm:$0xff]
  %v177 = vld [vmem:[%s1 + $0x1c0] sm:$0xff]
  %v178 = vld [vmem:[%s1 + $0x1c8] sm:$0xff]
  %v179 = vld [vmem:[%s1 + $0x1d0] sm:$0xff]
  %v180 = vld [vmem:[%s1 + $0x1d8] sm:$0xff]
  %v181 = vld [vmem:[%s1 + $0x1e0] sm:$0xff]
  %v182 = vld [vmem:[%s1 + $0x1e8] sm:$0xff]
  %v183 = vld [vmem:[%s1 + $0x1f0] sm:$0xff]
  %v184 = vld [vmem:[%s1 + $0x1f8] sm:$0xff]
  %v185 = vld [vmem:[%s1 + $0x200] sm:$0xff]
  %v186 = vld [vmem:[%s1 + $0x208] sm:$0xff]
  %v187 = vld [vmem:[%s1 + $0x210] sm:$0xff]
  %v188 = vld [vmem:[%s1 + $0x218] sm:$0xff]
  %v189 = vld [vmem:[%s1 + $0x220] sm:$0xff]
  %v190 = vld [vmem:[%s1 + $0x228] sm:$0xff]
  %v191 = vld [vmem:[%s1 + $0x230] sm:$0xff]
  %v192 = vld [vmem:[%s1 + $0x238] sm:$0xff]
  %v193 = vld [vmem:[%s1 + $0x240] sm:$0xff]
  %v194 = vld [vmem:[%s1 + $0x248] sm:$0xff]
  %v195 = vld [vmem:[%s1 + $0x250] sm:$0xff]
  %v196 = vld [vmem:[%s1 + $0x258] sm:$0xff]
  %v197 = vld [vmem:[%s1 + $0x260] sm:$0xff]
  %v198 = vld [vmem:[%s1 + $0x268] sm:$0xff]
  %v199 = vld [vmem:[%s1 + $0x270] sm:$0xff]
  %v200 = vld [vmem:[%s1 + $0x278] sm:$0xff]
  %v201 = vld [vmem:[%s1 + $0x280] sm:$0xff]
  %v202 = vld [vmem:[%s1 + $0x288] sm:$0xff]
  %v203 = vld [vmem:[%s1 + $0x290] sm:$0xff]
  %v204 = vld [vmem:[%s1 + $0x298] sm:$0xff]
  %v205 = vld [vmem:[%s1 + $0x2a0] sm:$0xff]
  %v206 = vld [vmem:[%s1 + $0x2a8] sm:$0xff]
  %v207 = vld [vmem:[%s1 + $0x2b0] sm:$0xff]
  %v208 = vld [vmem:[%s1 + $0x2b8] sm:$0xff]
  %v209 = vld [vmem:[%s1 + $0x2c0] sm:$0xff]
  %v210 = vld [vmem:[%s1 + $0x2c8] sm:$0xff]
  %v211 = vld [vmem:[%s1 + $0x2d0] sm:$0xff]
  %v212 = vld [vmem:[%s1 + $0x2d8] sm:$0xff]
  %v213 = vld [vmem:[%s1 + $0x2e0] sm:$0xff]
  %v214 = vld [vmem:[%s1 + $0x2e8] sm:$0xff]
  %v215 = vld [vmem:[%s1 + $0x2f0] sm:$0xff]
  %v216 = vld [vmem:[%s1 + $0x2f8] sm:$0xff]
  %v217 = vld [vmem:[%s1 + $0x300] sm:$0xff]
  %v218 = vld [vmem:[%s1 + $0x308] sm:$0xff]
  %v219 = vld [vmem:[%s1 + $0x310] sm:$0xff]
  %v220 = vld [vmem:[%s1 + $0x318] sm:$0xff]
  %v221 = vld [vmem:[%s1 + $0x320] sm:$0xff]
  %v222 = vld [vmem:[%s1 + $0x328] sm:$0xff]
  %v223 = vld [vmem:[%s1 + $0x330] sm:$0xff]
  %v224 = vld [vmem:[%s1 + $0x338] sm:$0xff]
  %v225 = vld [vmem:[%s1 + $0x340] sm:$0xff]
  %v226 = vld [vmem:[%s1 + $0x348] sm:$0xff]
  %v227 = vld [vmem:[%s1 + $0x350] sm:$0xff]
  %v228 = vld [vmem:[%s1 + $0x358] sm:$0xff]
  %v229 = vld [vmem:[%s1 + $0x360] sm:$0xff]
  %v230 = vld [vmem:[%s1 + $0x368] sm:$0xff]
  %v231 = vld [vmem:[%s1 + $0x370] sm:$0xff]
  %v232 = vld [vmem:[%s1 + $0x378] sm:$0xff]
  %v233 = vld [vmem:[%s1 + $0x380] sm:$0xff]
  %v234 = vld [vmem:[%s1 + $0x388] sm:$0xff]
  %v235 = vld [vmem:[%s1 + $0x390] sm:$0xff]
  %v236 = vld [vmem:[%s1 + $0x398] sm:$0xff]
  %v237 = vld [vmem:[%s1 + $0x3a0] sm:$0xff]
  %v238 = vld [vmem:[%s1 + $0x3a8] sm:$0xff]
  %v239 = vld [vmem:[%s1 + $0x3b0] sm:$0xff]
  %v240 = vld [vmem:[%s1 + $0x3b8] sm:$0xff]
  %v241 = vld [vmem:[%s1 + $0x3c0] sm:$0xff]
  %v242 = vld [vmem:[%s1 + $0x3c8] sm:$0xff]
  %v243 = vld [vmem:[%s1 + $0x3d0] sm:$0xff]
  %v244 = vld [vmem:[%s1 + $0x3d8] sm:$0xff]
  %v245 = vld [vmem:[%s1 + $0x3e0] sm:$0xff]
  %v246 = vld [vmem:[%s1 + $0x3e8] sm:$0xff]
  %v247 = vld [vmem:[%s1 + $0x3f0] sm:$0xff]
  %v248 = vld [vmem:[%s1 + $0x3f8] sm:$0xff]
  %v249 = vld [vmem:[%s1 + $0x400] sm:$0xff]
  %v250 = vld [vmem:[%s1 + $0x408] sm:$0xff]
  %v251 = vld [vmem:[%s1 + $0x410] sm:$0xff]
  %v252 = vld [vmem:[%s1 + $0x418] sm:$0xff]
  %v253 = vld [vmem:[%s1 + $0x420] sm:$0xff]
  %v254 = vld [vmem:[%s1 + $0x428] sm:$0xff]
  %v255 = vld [vmem:[%s1 + $0x430] sm:$0xff]
  %v256 = vld [vmem:[%s1 + $0x438] sm:$0xff]
  %v257 = vld [vmem:[%s1 + $0x440] sm:$0xff]
  %v258 = vld [vmem:[%s1 + $0x448] sm:$0xff]
  %v259 = vld [vmem:[%s1 + $0x450] sm:$0xff]
  %v260 = vld [vmem:[%s1 + $0x458] sm:$0xff]
  %v261 = vld [vmem:[%s1 + $0x460] sm:$0xff]
  %v262 = vld [vmem:[%s1 + $0x468] sm:$0xff]
  %v263 = vld [vmem:[%s1 + $0x470] sm:$0xff]
  %v264 = vld [vmem:[%s1 + $0x478] sm:$0xff]
  %v265 = vld [vmem:[%s1 + $0x480] sm:$0xff]
  %v266 = vld [vmem:[%s1 + $0x488] sm:$0xff]
  %v267 = vld [vmem:[%s1 + $0x490] sm:$0xff]
  %v268 = vld [vmem:[%s1 + $0x498] sm:$0xff]
  %v269 = vld [vmem:[%s1 + $0x4a0] sm:$0xff]
  %v270 = vld [vmem:[%s1 + $0x4a8] sm:$0xff]
  %v271 = vld [vmem:[%s1 + $0x4b0] sm:$0xff]
  %v272 = vld [vmem:[%s1 + $0x4b8] sm:$0xff]
  %v273 = vld [vmem:[%s1 + $0x4c0] sm:$0xff]
  %v274 = vld [vmem:[%s1 + $0x4c8] sm:$0xff]
  %v275 = vld [vmem:[%s1 + $0x4d0] sm:$0xff]
  %v276 = vld [vmem:[%s1 + $0x4d8] sm:$0xff]
  %v277 = vld [vmem:[%s1 + $0x4e0] sm:$0xff]
  %v278 = vld [vmem:[%s1 + $0x4e8] sm:$0xff]
  %v279 = vld [vmem:[%s1 + $0x4f0] sm:$0xff]
  %v280 = vld [vmem:[%s1 + $0x4f8] sm:$0xff]
  %v281 = vld [vmem:[%s1 + $0x500] sm:$0xff]
  %v282 = vld [vmem:[%s1 + $0x508] sm:$0xff]
  %v283 = vld [vmem:[%s1 + $0x510] sm:$0xff]
  %v284 = vld [vmem:[%s1 + $0x518] sm:$0xff]
  %v285 = vld [vmem:[%s1 + $0x520] sm:$0xff]
  %v286 = vld [vmem:[%s1 + $0x528] sm:$0xff]
  %v287 = vld [vmem:[%s1 + $0x530] sm:$0xff]
  %v288 = vld [vmem:[%s1 + $0x538] sm:$0xff]
  %v289 = vld [vmem:[%s1 + $0x540] sm:$0xff]
  %v290 = vld [vmem:[%s1 + $0x548] sm:$0xff]
  %v291 = vld [vmem:[%s1 + $0x550] sm:$0xff]
  %v292 = vld [vmem:[%s1 + $0x558] sm:$0xff]
  %v293 = vld [vmem:[%s1 + $0x560] sm:$0xff]
  %v294 = vld [vmem:[%s1 + $0x568] sm:$0xff]
  %v295 = vld [vmem:[%s1 + $0x570] sm:$0xff]
  %v296 = vld [vmem:[%s1 + $0x578] sm:$0xff]
  %v297 = vld [vmem:[%s1 + $0x580] sm:$0xff]
  %v298 = vld [vmem:[%s1 + $0x588] sm:$0xff]
  %v299 = vld [vmem:[%s1 + $0x590] sm:$0xff]
  %v300 = vld [vmem:[%s1 + $0x598] sm:$0xff]
  %v301 = vld [vmem:[%s1 + $0x5a0] sm:$0xff]
  %v302 = vld [vmem:[%s1 + $0x5a8] sm:$0xff]
  %v303 = vld [vmem:[%s1 + $0x5b0] sm:$0xff]
  %v304 = vld [vmem:[%s1 + $0x5b8] sm:$0xff]
  %v305 = vld [vmem:[%s1 + $0x5c0] sm:$0xff]
  %v306 = vld [vmem:[%s1 + $0x5c8] sm:$0xff]
  %v307 = vld [vmem:[%s1 + $0x5d0] sm:$0xff]
  %v308 = vld [vmem:[%s1 + $0x5d8] sm:$0xff]
  %v309 = vld [vmem:[%s1 + $0x5e0] sm:$0xff]
  %v310 = vld [vmem:[%s1 + $0x5e8] sm:$0xff]
  %v311 = vld [vmem:[%s1 + $0x5f0] sm:$0xff]
  %v312 = vld [vmem:[%s1 + $0x5f8] sm:$0xff]
  %v313 = vld [vmem:[%s1 + $0x600] sm:$0xff]
  %v314 = vld [vmem:[%s1 + $0x608] sm:$0xff]
  %v315 = vld [vmem:[%s1 + $0x610] sm:$0xff]
  %v316 = vld [vmem:[%s1 + $0x618] sm:$0xff]
  %v317 = vld [vmem:[%s1 + $0x620] sm:$0xff]
  %v318 = vld [vmem:[%s1 + $0x628] sm:$0xff]
  %v319 = vld [vmem:[%s1 + $0x630] sm:$0xff]
  %v320 = vld [vmem:[%s1 + $0x638] sm:$0xff]
  %v321 = vld [vmem:[%s1 + $0x640] sm:$0xff]
  %v322 = vld [vmem:[%s1 + $0x648] sm:$0xff]
  %v323 = vld [vmem:[%s1 + $0x650] sm:$0xff]
  %v324 = vld [vmem:[%s1 + $0x658] sm:$0xff]
  %v325 = vld [vmem:[%s1 + $0x660] sm:$0xff]
  %v326 = vld [vmem:[%s1 + $0x668] sm:$0xff]
  %v327 = vld [vmem:[%s1 + $0x670] sm:$0xff]
  %v328 = vld [vmem:[%s1 + $0x678] sm:$0xff]
  %v329 = vld [vmem:[%s1 + $0x680] sm:$0xff]
  %v330 = vld [vmem:[%s1 + $0x688] sm:$0xff]
  %v331 = vld [vmem:[%s1 + $0x690] sm:$0xff]
  %v332 = vld [vmem:[%s1 + $0x698] sm:$0xff]
  %v333 = vld [vmem:[%s1 + $0x6a0] sm:$0xff]
  %v334 = vld [vmem:[%s1 + $0x6a8] sm:$0xff]
  %v335 = vld [vmem:[%s1 + $0x6b0] sm:$0xff]
  %v336 = vld [vmem:[%s1 + $0x6b8] sm:$0xff]
  %v337 = vld [vmem:[%s1 + $0x6c0] sm:$0xff]
  %v338 = vld [vmem:[%s1 + $0x6c8] sm:$0xff]
  %v339 = vld [vmem:[%s1 + $0x6d0] sm:$0xff]
  %v340 = vld [vmem:[%s1 + $0x6d8] sm:$0xff]
  %vm341 = vcmask 457728
  %v343 = vsel %vm341, %v124, 0
  %v346 = vsel %vm341, %v128, 0
  %v349 = vsel %vm341, %v132, 0
  %v352 = vsel %vm341, %v136, 0
  %v355 = vsel %vm341, %v140, 0
  %v358 = vsel %vm341, %v144, 0
  %v361 = vsel %vm341, %v148, 0
  %v364 = vsel %vm341, %v152, 0
  %v367 = vsel %vm341, %v156, 0
  %v370 = vsel %vm341, %v160, 0
  %v373 = vsel %vm341, %v164, 0
  %v376 = vsel %vm341, %v168, 0
  %v379 = vsel %vm341, %v172, 0
  %v382 = vsel %vm341, %v176, 0
  %v385 = vsel %vm341, %v180, 0
  %v388 = vsel %vm341, %v184, 0
  %v391 = vsel %vm341, %v188, 0
  %v394 = vsel %vm341, %v192, 0
  %v397 = vsel %vm341, %v196, 0
  %v400 = vsel %vm341, %v200, 0
  %v403 = vsel %vm341, %v204, 0
  %v406 = vsel %vm341, %v208, 0
  %v409 = vsel %vm341, %v212, 0
  %v412 = vsel %vm341, %v216, 0
  %v415 = vsel %vm341, %v220, 0
  %v418 = vsel %vm341, %v224, 0
  %v421 = vsel %vm341, %v228, 0
  %v424 = vsel %vm341, %v232, 0
  %v427 = vsel %vm341, %v236, 0
  %v430 = vsel %vm341, %v240, 0
  %v433 = vsel %vm341, %v244, 0
  %v436 = vsel %vm341, %v248, 0
  %v439 = vsel %vm341, %v252, 0
  %v442 = vsel %vm341, %v256, 0
  %v445 = vsel %vm341, %v260, 0
  %v448 = vsel %vm341, %v264, 0
  %v451 = vsel %vm341, %v268, 0
  %v454 = vsel %vm341, %v272, 0
  %v457 = vsel %vm341, %v276, 0
  %v460 = vsel %vm341, %v280, 0
  %v463 = vsel %vm341, %v284, 0
  %v466 = vsel %vm341, %v288, 0
  %v469 = vsel %vm341, %v292, 0
  %v472 = vsel %vm341, %v296, 0
  %v475 = vsel %vm341, %v300, 0
  %v478 = vsel %vm341, %v304, 0
  %v481 = vsel %vm341, %v308, 0
  %v484 = vsel %vm341, %v312, 0
  %v487 = vsel %vm341, %v316, 0
  %v490 = vsel %vm341, %v320, 0
  %v493 = vsel %vm341, %v324, 0
  %v496 = vsel %vm341, %v328, 0
  %v499 = vsel %vm341, %v332, 0
  %v502 = vsel %vm341, %v336, 0
  %v505 = vsel %vm341, %v340, 0
  %507 = vmatprep.subr.mxu0 0.0
  %508 = vmatpush1.msra.mxu0 %v81
  %509 = vmatprep.subr.mxu0 0.0
  %510 = vmatpush1.msra.mxu0 %v80
  %511 = vmatprep.subr.mxu0 0.0
  %512 = vmatpush1.msra.mxu0 %v79
  %513 = vmatprep.subr.mxu0 0.0
  %514 = vmatpush1.msra.mxu0 %v78
  %515 = vmatprep.subr.mxu0 0.0
  %516 = vmatpush1.msra.mxu0 %v77
  %517 = vmatprep.subr.mxu0 0.0
  %518 = vmatpush1.msra.mxu0 %v76
  %519 = vmatprep.subr.mxu0 0.0
  %520 = vmatpush1.msra.mxu0 %v75
  %521 = vmatprep.subr.mxu0 0.0
  %522 = vmatpush1.msra.mxu0 %v74
  %523 = vmatprep.subr.mxu0 0.0
  %524 = vmatpush1.msra.mxu0 %v73
  %525 = vmatprep.subr.mxu0 0.0
  %526 = vmatpush1.msra.mxu0 %v72
  %527 = vmatprep.subr.mxu0 0.0
  %528 = vmatpush1.msra.mxu0 %v71
  %529 = vmatprep.subr.mxu0 0.0
  %530 = vmatpush1.msra.mxu0 %v70
  %531 = vmatprep.subr.mxu0 0.0
  %532 = vmatpush1.msra.mxu0 %v69
  %533 = vmatprep.subr.mxu0 0.0
  %534 = vmatpush1.msra.mxu0 %v68
  %535 = vmatprep.subr.mxu0 0.0
  %536 = vmatpush1.msra.mxu0 %v67
  %537 = vmatprep.subr.mxu0 0.0
  %538 = vmatpush1.msra.mxu0 %v66
  %539 = vmatprep.subr.mxu0 0.0
  %540 = vmatpush2.msra.mxu0 %v97
  %541 = vmatprep.subr.mxu0 0.0
  %542 = vmatpush2.msra.mxu0 %v96
  %543 = vmatprep.subr.mxu0 0.0
  %544 = vmatpush2.msra.mxu0 %v95
  %545 = vmatprep.subr.mxu0 0.0
  %546 = vmatpush2.msra.mxu0 %v94
  %547 = vmatprep.subr.mxu0 0.0
  %548 = vmatpush2.msra.mxu0 %v93
  %549 = vmatprep.subr.mxu0 0.0
  %550 = vmatpush2.msra.mxu0 %v92
  %551 = vmatprep.subr.mxu0 0.0
  %552 = vmatpush2.msra.mxu0 %v91
  %553 = vmatprep.subr.mxu0 0.0
  %554 = vmatpush2.msra.mxu0 %v90
  %555 = vmatprep.subr.mxu0 0.0
  %556 = vmatpush2.msra.mxu0 %v89
  %557 = vmatprep.subr.mxu0 0.0
  %558 = vmatpush2.msra.mxu0 %v88
  %559 = vmatprep.subr.mxu0 0.0
  %560 = vmatpush2.msra.mxu0 %v87
  %561 = vmatprep.subr.mxu0 0.0
  %562 = vmatpush2.msra.mxu0 %v86
  %563 = vmatprep.subr.mxu0 0.0
  %564 = vmatpush2.msra.mxu0 %v85
  %565 = vmatprep.subr.mxu0 0.0
  %566 = vmatpush2.msra.mxu0 %v84
  %567 = vmatprep.subr.mxu0 0.0
  %568 = vmatpush2.msra.mxu0 %v83
  %569 = vmatprep.subr.mxu0 0.0
  %570 = vmatpush2.msra.mxu0 %v82
  %571 = vmatprep.mubr.f32.mxu0 %v122
  %572 = vmatmul.mubr.f32.gmra.mxu0 %v121
  %v573 = vpop.f32.mrf.mxu0
  %v574 = vadd.f32 0.0, %v573
  %v575 = vpop.f32.mrf.mxu0
  %576 = vmatprep.mubr.f32.mxu0 %v126
  %577 = vmatmul.mubr.f32.gmra.mxu0 %v125
  %v578 = vpop.f32.mrf.mxu0
  %v579 = vadd.f32 0.0, %v578
  %v580 = vpop.f32.mrf.mxu0
  %581 = vmatprep.mubr.f32.mxu0 %v130
  %582 = vmatmul.mubr.f32.gmra.mxu0 %v129
  %v583 = vpop.f32.mrf.mxu0
  %v584 = vadd.f32 0.0, %v583
  %v585 = vpop.f32.mrf.mxu0
  %586 = vmatprep.mubr.f32.mxu0 %v134
  %587 = vmatmul.mubr.f32.gmra.mxu0 %v133
  %v588 = vpop.f32.mrf.mxu0
  %v589 = vadd.f32 0.0, %v588
  %v590 = vpop.f32.mrf.mxu0
  %591 = vmatprep.mubr.f32.mxu0 %v138
  %592 = vmatmul.mubr.f32.gmra.mxu0 %v137
  %v593 = vpop.f32.mrf.mxu0
  %v594 = vadd.f32 0.0, %v593
  %v595 = vpop.f32.mrf.mxu0
  %596 = vmatprep.mubr.f32.mxu0 %v142
  %597 = vmatmul.mubr.f32.gmra.mxu0 %v141
  %v598 = vpop.f32.mrf.mxu0
  %v599 = vadd.f32 0.0, %v598
  %v600 = vpop.f32.mrf.mxu0
  %601 = vmatprep.mubr.f32.mxu0 %v146
  %602 = vmatmul.mubr.f32.gmra.mxu0 %v145
  %v603 = vpop.f32.mrf.mxu0
  %v604 = vadd.f32 0.0, %v603
  %v605 = vpop.f32.mrf.mxu0
  %606 = vmatprep.mubr.f32.mxu0 %v150
  %607 = vmatmul.mubr.f32.gmra.mxu0 %v149
  %v608 = vpop.f32.mrf.mxu0
  %v609 = vadd.f32 0.0, %v608
  %v610 = vpop.f32.mrf.mxu0
  %611 = vmatprep.mubr.f32.mxu0 %v154
  %612 = vmatmul.mubr.f32.gmra.mxu0 %v153
  %v613 = vpop.f32.mrf.mxu0
  %v614 = vadd.f32 0.0, %v613
  %v615 = vpop.f32.mrf.mxu0
  %616 = vmatprep.mubr.f32.mxu0 %v158
  %617 = vmatmul.mubr.f32.gmra.mxu0 %v157
  %v618 = vpop.f32.mrf.mxu0
  %v619 = vadd.f32 0.0, %v618
  %v620 = vpop.f32.mrf.mxu0
  %621 = vmatprep.mubr.f32.mxu0 %v162
  %622 = vmatmul.mubr.f32.gmra.mxu0 %v161
  %v623 = vpop.f32.mrf.mxu0
  %v624 = vadd.f32 0.0, %v623
  %v625 = vpop.f32.mrf.mxu0
  %626 = vmatprep.mubr.f32.mxu0 %v166
  %627 = vmatmul.mubr.f32.gmra.mxu0 %v165
  %v628 = vpop.f32.mrf.mxu0
  %v629 = vadd.f32 0.0, %v628
  %v630 = vpop.f32.mrf.mxu0
  %631 = vmatprep.mubr.f32.mxu0 %v170
  %632 = vmatmul.mubr.f32.gmra.mxu0 %v169
  %v633 = vpop.f32.mrf.mxu0
  %v634 = vadd.f32 0.0, %v633
  %v635 = vpop.f32.mrf.mxu0
  %636 = vmatprep.mubr.f32.mxu0 %v174
  %637 = vmatmul.mubr.f32.gmra.mxu0 %v173
  %v638 = vpop.f32.mrf.mxu0
  %v639 = vadd.f32 0.0, %v638
  %v640 = vpop.f32.mrf.mxu0
  %641 = vmatprep.mubr.f32.mxu0 %v178
  %642 = vmatmul.mubr.f32.gmra.mxu0 %v177
  %v643 = vpop.f32.mrf.mxu0
  %v644 = vadd.f32 0.0, %v643
  %v645 = vpop.f32.mrf.mxu0
  %646 = vmatprep.mubr.f32.mxu0 %v182
  %647 = vmatmul.mubr.f32.gmra.mxu0 %v181
  %v648 = vpop.f32.mrf.mxu0
  %v649 = vadd.f32 0.0, %v648
  %v650 = vpop.f32.mrf.mxu0
  %651 = vmatprep.mubr.f32.mxu0 %v186
  %652 = vmatmul.mubr.f32.gmra.mxu0 %v185
  %v653 = vpop.f32.mrf.mxu0
  %v654 = vadd.f32 0.0, %v653
  %v655 = vpop.f32.mrf.mxu0
  %656 = vmatprep.mubr.f32.mxu0 %v190
  %657 = vmatmul.mubr.f32.gmra.mxu0 %v189
  %v658 = vpop.f32.mrf.mxu0
  %v659 = vadd.f32 0.0, %v658
  %v660 = vpop.f32.mrf.mxu0
  %661 = vmatprep.mubr.f32.mxu0 %v194
  %662 = vmatmul.mubr.f32.gmra.mxu0 %v193
  %v663 = vpop.f32.mrf.mxu0
  %v664 = vadd.f32 0.0, %v663
  %v665 = vpop.f32.mrf.mxu0
  %666 = vmatprep.mubr.f32.mxu0 %v198
  %667 = vmatmul.mubr.f32.gmra.mxu0 %v197
  %v668 = vpop.f32.mrf.mxu0
  %v669 = vadd.f32 0.0, %v668
  %v670 = vpop.f32.mrf.mxu0
  %671 = vmatprep.mubr.f32.mxu0 %v202
  %672 = vmatmul.mubr.f32.gmra.mxu0 %v201
  %v673 = vpop.f32.mrf.mxu0
  %v674 = vadd.f32 0.0, %v673
  %v675 = vpop.f32.mrf.mxu0
  %676 = vmatprep.mubr.f32.mxu0 %v206
  %677 = vmatmul.mubr.f32.gmra.mxu0 %v205
  %v678 = vpop.f32.mrf.mxu0
  %v679 = vadd.f32 0.0, %v678
  %v680 = vpop.f32.mrf.mxu0
  %681 = vmatprep.mubr.f32.mxu0 %v210
  %682 = vmatmul.mubr.f32.gmra.mxu0 %v209
  %v683 = vpop.f32.mrf.mxu0
  %v684 = vadd.f32 0.0, %v683
  %v685 = vpop.f32.mrf.mxu0
  %686 = vmatprep.mubr.f32.mxu0 %v214
  %687 = vmatmul.mubr.f32.gmra.mxu0 %v213
  %v688 = vpop.f32.mrf.mxu0
  %v689 = vadd.f32 0.0, %v688
  %v690 = vpop.f32.mrf.mxu0
  %691 = vmatprep.mubr.f32.mxu0 %v218
  %692 = vmatmul.mubr.f32.gmra.mxu0 %v217
  %v693 = vpop.f32.mrf.mxu0
  %v694 = vadd.f32 0.0, %v693
  %v695 = vpop.f32.mrf.mxu0
  %696 = vmatprep.mubr.f32.mxu0 %v222
  %697 = vmatmul.mubr.f32.gmra.mxu0 %v221
  %v698 = vpop.f32.mrf.mxu0
  %v699 = vadd.f32 0.0, %v698
  %v700 = vpop.f32.mrf.mxu0
  %701 = vmatprep.mubr.f32.mxu0 %v226
  %702 = vmatmul.mubr.f32.gmra.mxu0 %v225
  %v703 = vpop.f32.mrf.mxu0
  %v704 = vadd.f32 0.0, %v703
  %v705 = vpop.f32.mrf.mxu0
  %706 = vmatprep.mubr.f32.mxu0 %v230
  %707 = vmatmul.mubr.f32.gmra.mxu0 %v229
  %v708 = vpop.f32.mrf.mxu0
  %v709 = vadd.f32 0.0, %v708
  %v710 = vpop.f32.mrf.mxu0
  %711 = vmatprep.mubr.f32.mxu0 %v234
  %712 = vmatmul.mubr.f32.gmra.mxu0 %v233
  %v713 = vpop.f32.mrf.mxu0
  %v714 = vadd.f32 0.0, %v713
  %v715 = vpop.f32.mrf.mxu0
  %716 = vmatprep.mubr.f32.mxu0 %v238
  %717 = vmatmul.mubr.f32.gmra.mxu0 %v237
  %v718 = vpop.f32.mrf.mxu0
  %v719 = vadd.f32 0.0, %v718
  %v720 = vpop.f32.mrf.mxu0
  %721 = vmatprep.mubr.f32.mxu0 %v242
  %722 = vmatmul.mubr.f32.gmra.mxu0 %v241
  %v723 = vpop.f32.mrf.mxu0
  %v724 = vadd.f32 0.0, %v723
  %v725 = vpop.f32.mrf.mxu0
  %726 = vmatprep.mubr.f32.mxu0 %v246
  %727 = vmatmul.mubr.f32.gmra.mxu0 %v245
  %v728 = vpop.f32.mrf.mxu0
  %v729 = vadd.f32 0.0, %v728
  %v730 = vpop.f32.mrf.mxu0
  %731 = vmatprep.mubr.f32.mxu0 %v250
  %732 = vmatmul.mubr.f32.gmra.mxu0 %v249
  %v733 = vpop.f32.mrf.mxu0
  %v734 = vadd.f32 0.0, %v733
  %v735 = vpop.f32.mrf.mxu0
  %736 = vmatprep.mubr.f32.mxu0 %v254
  %737 = vmatmul.mubr.f32.gmra.mxu0 %v253
  %v738 = vpop.f32.mrf.mxu0
  %v739 = vadd.f32 0.0, %v738
  %v740 = vpop.f32.mrf.mxu0
  %741 = vmatprep.mubr.f32.mxu0 %v258
  %742 = vmatmul.mubr.f32.gmra.mxu0 %v257
  %v743 = vpop.f32.mrf.mxu0
  %v744 = vadd.f32 0.0, %v743
  %v745 = vpop.f32.mrf.mxu0
  %746 = vmatprep.mubr.f32.mxu0 %v262
  %747 = vmatmul.mubr.f32.gmra.mxu0 %v261
  %v748 = vpop.f32.mrf.mxu0
  %v749 = vadd.f32 0.0, %v748
  %v750 = vpop.f32.mrf.mxu0
  %751 = vmatprep.mubr.f32.mxu0 %v266
  %752 = vmatmul.mubr.f32.gmra.mxu0 %v265
  %v753 = vpop.f32.mrf.mxu0
  %v754 = vadd.f32 0.0, %v753
  %v755 = vpop.f32.mrf.mxu0
  %756 = vmatprep.mubr.f32.mxu0 %v270
  %757 = vmatmul.mubr.f32.gmra.mxu0 %v269
  %v758 = vpop.f32.mrf.mxu0
  %v759 = vadd.f32 0.0, %v758
  %v760 = vpop.f32.mrf.mxu0
  %761 = vmatprep.mubr.f32.mxu0 %v274
  %762 = vmatmul.mubr.f32.gmra.mxu0 %v273
  %v763 = vpop.f32.mrf.mxu0
  %v764 = vadd.f32 0.0, %v763
  %v765 = vpop.f32.mrf.mxu0
  %766 = vmatprep.mubr.f32.mxu0 %v278
  %767 = vmatmul.mubr.f32.gmra.mxu0 %v277
  %v768 = vpop.f32.mrf.mxu0
  %v769 = vadd.f32 0.0, %v768
  %v770 = vpop.f32.mrf.mxu0
  %771 = vmatprep.mubr.f32.mxu0 %v282
  %772 = vmatmul.mubr.f32.gmra.mxu0 %v281
  %v773 = vpop.f32.mrf.mxu0
  %v774 = vadd.f32 0.0, %v773
  %v775 = vpop.f32.mrf.mxu0
  %776 = vmatprep.mubr.f32.mxu0 %v286
  %777 = vmatmul.mubr.f32.gmra.mxu0 %v285
  %v778 = vpop.f32.mrf.mxu0
  %v779 = vadd.f32 0.0, %v778
  %v780 = vpop.f32.mrf.mxu0
  %781 = vmatprep.mubr.f32.mxu0 %v290
  %782 = vmatmul.mubr.f32.gmra.mxu0 %v289
  %v783 = vpop.f32.mrf.mxu0
  %v784 = vadd.f32 0.0, %v783
  %v785 = vpop.f32.mrf.mxu0
  %786 = vmatprep.mubr.f32.mxu0 %v294
  %787 = vmatmul.mubr.f32.gmra.mxu0 %v293
  %v788 = vpop.f32.mrf.mxu0
  %v789 = vadd.f32 0.0, %v788
  %v790 = vpop.f32.mrf.mxu0
  %791 = vmatprep.mubr.f32.mxu0 %v298
  %792 = vmatmul.mubr.f32.gmra.mxu0 %v297
  %v793 = vpop.f32.mrf.mxu0
  %v794 = vadd.f32 0.0, %v793
  %v795 = vpop.f32.mrf.mxu0
  %796 = vmatprep.mubr.f32.mxu0 %v302
  %797 = vmatmul.mubr.f32.gmra.mxu0 %v301
  %v798 = vpop.f32.mrf.mxu0
  %v799 = vadd.f32 0.0, %v798
  %v800 = vpop.f32.mrf.mxu0
  %801 = vmatprep.mubr.f32.mxu0 %v306
  %802 = vmatmul.mubr.f32.gmra.mxu0 %v305
  %v803 = vpop.f32.mrf.mxu0
  %v804 = vadd.f32 0.0, %v803
  %v805 = vpop.f32.mrf.mxu0
  %806 = vmatprep.mubr.f32.mxu0 %v310
  %807 = vmatmul.mubr.f32.gmra.mxu0 %v309
  %v808 = vpop.f32.mrf.mxu0
  %v809 = vadd.f32 0.0, %v808
  %v810 = vpop.f32.mrf.mxu0
  %811 = vmatprep.mubr.f32.mxu0 %v314
  %812 = vmatmul.mubr.f32.gmra.mxu0 %v313
  %v813 = vpop.f32.mrf.mxu0
  %v814 = vadd.f32 0.0, %v813
  %v815 = vpop.f32.mrf.mxu0
  %816 = vmatprep.mubr.f32.mxu0 %v318
  %817 = vmatmul.mubr.f32.gmra.mxu0 %v317
  %v818 = vpop.f32.mrf.mxu0
  %v819 = vadd.f32 0.0, %v818
  %v820 = vpop.f32.mrf.mxu0
  %821 = vmatprep.mubr.f32.mxu0 %v322
  %822 = vmatmul.mubr.f32.gmra.mxu0 %v321
  %v823 = vpop.f32.mrf.mxu0
  %v824 = vadd.f32 0.0, %v823
  %v825 = vpop.f32.mrf.mxu0
  %826 = vmatprep.mubr.f32.mxu0 %v326
  %827 = vmatmul.mubr.f32.gmra.mxu0 %v325
  %v828 = vpop.f32.mrf.mxu0
  %v829 = vadd.f32 0.0, %v828
  %v830 = vpop.f32.mrf.mxu0
  %831 = vmatprep.mubr.f32.mxu0 %v330
  %832 = vmatmul.mubr.f32.gmra.mxu0 %v329
  %v833 = vpop.f32.mrf.mxu0
  %v834 = vadd.f32 0.0, %v833
  %v835 = vpop.f32.mrf.mxu0
  %836 = vmatprep.mubr.f32.mxu0 %v334
  %837 = vmatmul.mubr.f32.gmra.mxu0 %v333
  %v838 = vpop.f32.mrf.mxu0
  %v839 = vadd.f32 0.0, %v838
  %v840 = vpop.f32.mrf.mxu0
  %841 = vmatprep.mubr.f32.mxu0 %v338
  %842 = vmatmul.mubr.f32.gmra.mxu0 %v337
  %v843 = vpop.f32.mrf.mxu0
  %v844 = vadd.f32 0.0, %v843
  %v845 = vpop.f32.mrf.mxu0
  %846 = vdwg.mxu0
  %847 = vmatprep.subr.mxu0 0.0
  %848 = vmatpush1.msra.mxu0 %v113
  %849 = vmatprep.subr.mxu0 0.0
  %850 = vmatpush1.msra.mxu0 %v112
  %851 = vmatprep.subr.mxu0 0.0
  %852 = vmatpush1.msra.mxu0 %v111
  %853 = vmatprep.subr.mxu0 0.0
  %854 = vmatpush1.msra.mxu0 %v110
  %855 = vmatprep.subr.mxu0 0.0
  %856 = vmatpush1.msra.mxu0 %v109
  %857 = vmatprep.subr.mxu0 0.0
  %858 = vmatpush1.msra.mxu0 %v108
  %859 = vmatprep.subr.mxu0 0.0
  %860 = vmatpush1.msra.mxu0 %v107
  %861 = vmatprep.subr.mxu0 0.0
  %862 = vmatpush1.msra.mxu0 %v106
  %863 = vmatprep.subr.mxu0 0.0
  %864 = vmatpush1.msra.mxu0 %v105
  %865 = vmatprep.subr.mxu0 0.0
  %866 = vmatpush1.msra.mxu0 %v104
  %867 = vmatprep.subr.mxu0 0.0
  %868 = vmatpush1.msra.mxu0 %v103
  %869 = vmatprep.subr.mxu0 0.0
  %870 = vmatpush1.msra.mxu0 %v102
  %871 = vmatprep.subr.mxu0 0.0
  %872 = vmatpush1.msra.mxu0 %v101
  %873 = vmatprep.subr.mxu0 0.0
  %874 = vmatpush1.msra.mxu0 %v100
  %875 = vmatprep.subr.mxu0 0.0
  %876 = vmatpush1.msra.mxu0 %v99
  %877 = vmatprep.subr.mxu0 0.0
  %878 = vmatpush1.msra.mxu0 %v98
  %879 = vmatprep.subr.mxu0 0.0
  %880 = vmatpush2.msra.mxu0 0.0
  %881 = vmatprep.subr.mxu0 0.0
  %882 = vmatpush2.msra.mxu0 0.0
  %883 = vmatprep.subr.mxu0 0.0
  %884 = vmatpush2.msra.mxu0 0.0
  %885 = vmatprep.subr.mxu0 0.0
  %886 = vmatpush2.msra.mxu0 0.0
  %887 = vmatprep.subr.mxu0 0.0
  %888 = vmatpush2.msra.mxu0 0.0
  %889 = vmatprep.subr.mxu0 0.0
  %890 = vmatpush2.msra.mxu0 0.0
  %891 = vmatprep.subr.mxu0 0.0
  %892 = vmatpush2.msra.mxu0 0.0
  %893 = vmatprep.subr.mxu0 0.0
  %894 = vmatpush2.msra.mxu0 0.0
  %895 = vmatprep.subr.mxu0 0.0
  %896 = vmatpush2.msra.mxu0 0.0
  %897 = vmatprep.subr.mxu0 0.0
  %898 = vmatpush2.msra.mxu0 %v120
  %899 = vmatprep.subr.mxu0 0.0
  %900 = vmatpush2.msra.mxu0 %v119
  %901 = vmatprep.subr.mxu0 0.0
  %902 = vmatpush2.msra.mxu0 %v118
  %903 = vmatprep.subr.mxu0 0.0
  %904 = vmatpush2.msra.mxu0 %v117
  %905 = vmatprep.subr.mxu0 0.0
  %906 = vmatpush2.msra.mxu0 %v116
  %907 = vmatprep.subr.mxu0 0.0
  %908 = vmatpush2.msra.mxu0 %v115
  %909 = vmatprep.subr.mxu0 0.0
  %910 = vmatpush2.msra.mxu0 %v114
  %911 = vmatprep.mubr.f32.mxu0 %v343
  %912 = vmatmul.mubr.f32.gmra.mxu0 %v123
  %v913 = vpop.f32.mrf.mxu0
  %v914 = vadd.f32 %v574, %v913
  %v915 = vpop.f32.mrf.mxu0
  %916 = vmatprep.mubr.f32.mxu0 %v346
  %917 = vmatmul.mubr.f32.gmra.mxu0 %v127
  %v918 = vpop.f32.mrf.mxu0
  %v919 = vadd.f32 %v579, %v918
  %v920 = vpop.f32.mrf.mxu0
  %921 = vmatprep.mubr.f32.mxu0 %v349
  %922 = vmatmul.mubr.f32.gmra.mxu0 %v131
  %v923 = vpop.f32.mrf.mxu0
  %v924 = vadd.f32 %v584, %v923
  %v925 = vpop.f32.mrf.mxu0
  %926 = vmatprep.mubr.f32.mxu0 %v352
  %927 = vmatmul.mubr.f32.gmra.mxu0 %v135
  %v928 = vpop.f32.mrf.mxu0
  %v929 = vadd.f32 %v589, %v928
  %v930 = vpop.f32.mrf.mxu0
  %931 = vmatprep.mubr.f32.mxu0 %v355
  %932 = vmatmul.mubr.f32.gmra.mxu0 %v139
  %v933 = vpop.f32.mrf.mxu0
  %v934 = vadd.f32 %v594, %v933
  %v935 = vpop.f32.mrf.mxu0
  %936 = vmatprep.mubr.f32.mxu0 %v358
  %937 = vmatmul.mubr.f32.gmra.mxu0 %v143
  %v938 = vpop.f32.mrf.mxu0
  %v939 = vadd.f32 %v599, %v938
  %v940 = vpop.f32.mrf.mxu0
  %941 = vmatprep.mubr.f32.mxu0 %v361
  %942 = vmatmul.mubr.f32.gmra.mxu0 %v147
  %v943 = vpop.f32.mrf.mxu0
  %v944 = vadd.f32 %v604, %v943
  %v945 = vpop.f32.mrf.mxu0
  %946 = vmatprep.mubr.f32.mxu0 %v364
  %947 = vmatmul.mubr.f32.gmra.mxu0 %v151
  %v948 = vpop.f32.mrf.mxu0
  %v949 = vadd.f32 %v609, %v948
  %v950 = vpop.f32.mrf.mxu0
  %951 = vmatprep.mubr.f32.mxu0 %v367
  %952 = vmatmul.mubr.f32.gmra.mxu0 %v155
  %v953 = vpop.f32.mrf.mxu0
  %v954 = vadd.f32 %v614, %v953
  %v955 = vpop.f32.mrf.mxu0
  %956 = vmatprep.mubr.f32.mxu0 %v370
  %957 = vmatmul.mubr.f32.gmra.mxu0 %v159
  %v958 = vpop.f32.mrf.mxu0
  %v959 = vadd.f32 %v619, %v958
  %v960 = vpop.f32.mrf.mxu0
  %961 = vmatprep.mubr.f32.mxu0 %v373
  %962 = vmatmul.mubr.f32.gmra.mxu0 %v163
  %v963 = vpop.f32.mrf.mxu0
  %v964 = vadd.f32 %v624, %v963
  %v965 = vpop.f32.mrf.mxu0
  %966 = vmatprep.mubr.f32.mxu0 %v376
  %967 = vmatmul.mubr.f32.gmra.mxu0 %v167
  %v968 = vpop.f32.mrf.mxu0
  %v969 = vadd.f32 %v629, %v968
  %v970 = vpop.f32.mrf.mxu0
  %971 = vmatprep.mubr.f32.mxu0 %v379
  %972 = vmatmul.mubr.f32.gmra.mxu0 %v171
  %v973 = vpop.f32.mrf.mxu0
  %v974 = vadd.f32 %v634, %v973
  %v975 = vpop.f32.mrf.mxu0
  %976 = vmatprep.mubr.f32.mxu0 %v382
  %977 = vmatmul.mubr.f32.gmra.mxu0 %v175
  %v978 = vpop.f32.mrf.mxu0
  %v979 = vadd.f32 %v639, %v978
  %v980 = vpop.f32.mrf.mxu0
  %981 = vmatprep.mubr.f32.mxu0 %v385
  %982 = vmatmul.mubr.f32.gmra.mxu0 %v179
  %v983 = vpop.f32.mrf.mxu0
  %v984 = vadd.f32 %v644, %v983
  %v985 = vpop.f32.mrf.mxu0
  %986 = vmatprep.mubr.f32.mxu0 %v388
  %987 = vmatmul.mubr.f32.gmra.mxu0 %v183
  %v988 = vpop.f32.mrf.mxu0
  %v989 = vadd.f32 %v649, %v988
  %v990 = vpop.f32.mrf.mxu0
  %991 = vmatprep.mubr.f32.mxu0 %v391
  %992 = vmatmul.mubr.f32.gmra.mxu0 %v187
  %v993 = vpop.f32.mrf.mxu0
  %v994 = vadd.f32 %v654, %v993
  %v995 = vpop.f32.mrf.mxu0
  %996 = vmatprep.mubr.f32.mxu0 %v394
  %997 = vmatmul.mubr.f32.gmra.mxu0 %v191
  %v998 = vpop.f32.mrf.mxu0
  %v999 = vadd.f32 %v659, %v998
  %v1000 = vpop.f32.mrf.mxu0
  %1001 = vmatprep.mubr.f32.mxu0 %v397
  %1002 = vmatmul.mubr.f32.gmra.mxu0 %v195
  %v1003 = vpop.f32.mrf.mxu0
  %v1004 = vadd.f32 %v664, %v1003
  %v1005 = vpop.f32.mrf.mxu0
  %1006 = vmatprep.mubr.f32.mxu0 %v400
  %1007 = vmatmul.mubr.f32.gmra.mxu0 %v199
  %v1008 = vpop.f32.mrf.mxu0
  %v1009 = vadd.f32 %v669, %v1008
  %v1010 = vpop.f32.mrf.mxu0
  %1011 = vmatprep.mubr.f32.mxu0 %v403
  %1012 = vmatmul.mubr.f32.gmra.mxu0 %v203
  %v1013 = vpop.f32.mrf.mxu0
  %v1014 = vadd.f32 %v674, %v1013
  %v1015 = vpop.f32.mrf.mxu0
  %1016 = vmatprep.mubr.f32.mxu0 %v406
  %1017 = vmatmul.mubr.f32.gmra.mxu0 %v207
  %v1018 = vpop.f32.mrf.mxu0
  %v1019 = vadd.f32 %v679, %v1018
  %v1020 = vpop.f32.mrf.mxu0
  %1021 = vmatprep.mubr.f32.mxu0 %v409
  %1022 = vmatmul.mubr.f32.gmra.mxu0 %v211
  %v1023 = vpop.f32.mrf.mxu0
  %v1024 = vadd.f32 %v684, %v1023
  %v1025 = vpop.f32.mrf.mxu0
  %1026 = vmatprep.mubr.f32.mxu0 %v412
  %1027 = vmatmul.mubr.f32.gmra.mxu0 %v215
  %v1028 = vpop.f32.mrf.mxu0
  %v1029 = vadd.f32 %v689, %v1028
  %v1030 = vpop.f32.mrf.mxu0
  %1031 = vmatprep.mubr.f32.mxu0 %v415
  %1032 = vmatmul.mubr.f32.gmra.mxu0 %v219
  %v1033 = vpop.f32.mrf.mxu0
  %v1034 = vadd.f32 %v694, %v1033
  %v1035 = vpop.f32.mrf.mxu0
  %1036 = vmatprep.mubr.f32.mxu0 %v418
  %1037 = vmatmul.mubr.f32.gmra.mxu0 %v223
  %v1038 = vpop.f32.mrf.mxu0
  %v1039 = vadd.f32 %v699, %v1038
  %v1040 = vpop.f32.mrf.mxu0
  %1041 = vmatprep.mubr.f32.mxu0 %v421
  %1042 = vmatmul.mubr.f32.gmra.mxu0 %v227
  %v1043 = vpop.f32.mrf.mxu0
  %v1044 = vadd.f32 %v704, %v1043
  %v1045 = vpop.f32.mrf.mxu0
  %1046 = vmatprep.mubr.f32.mxu0 %v424
  %1047 = vmatmul.mubr.f32.gmra.mxu0 %v231
  %v1048 = vpop.f32.mrf.mxu0
  %v1049 = vadd.f32 %v709, %v1048
  %v1050 = vpop.f32.mrf.mxu0
  %1051 = vmatprep.mubr.f32.mxu0 %v427
  %1052 = vmatmul.mubr.f32.gmra.mxu0 %v235
  %v1053 = vpop.f32.mrf.mxu0
  %v1054 = vadd.f32 %v714, %v1053
  %v1055 = vpop.f32.mrf.mxu0
  %1056 = vmatprep.mubr.f32.mxu0 %v430
  %1057 = vmatmul.mubr.f32.gmra.mxu0 %v239
  %v1058 = vpop.f32.mrf.mxu0
  %v1059 = vadd.f32 %v719, %v1058
  %v1060 = vpop.f32.mrf.mxu0
  %1061 = vmatprep.mubr.f32.mxu0 %v433
  %1062 = vmatmul.mubr.f32.gmra.mxu0 %v243
  %v1063 = vpop.f32.mrf.mxu0
  %v1064 = vadd.f32 %v724, %v1063
  %v1065 = vpop.f32.mrf.mxu0
  %1066 = vmatprep.mubr.f32.mxu0 %v436
  %1067 = vmatmul.mubr.f32.gmra.mxu0 %v247
  %v1068 = vpop.f32.mrf.mxu0
  %v1069 = vadd.f32 %v729, %v1068
  %v1070 = vpop.f32.mrf.mxu0
  %1071 = vmatprep.mubr.f32.mxu0 %v439
  %1072 = vmatmul.mubr.f32.gmra.mxu0 %v251
  %v1073 = vpop.f32.mrf.mxu0
  %v1074 = vadd.f32 %v734, %v1073
  %v1075 = vpop.f32.mrf.mxu0
  %1076 = vmatprep.mubr.f32.mxu0 %v442
  %1077 = vmatmul.mubr.f32.gmra.mxu0 %v255
  %v1078 = vpop.f32.mrf.mxu0
  %v1079 = vadd.f32 %v739, %v1078
  %v1080 = vpop.f32.mrf.mxu0
  %1081 = vmatprep.mubr.f32.mxu0 %v445
  %1082 = vmatmul.mubr.f32.gmra.mxu0 %v259
  %v1083 = vpop.f32.mrf.mxu0
  %v1084 = vadd.f32 %v744, %v1083
  %v1085 = vpop.f32.mrf.mxu0
  %1086 = vmatprep.mubr.f32.mxu0 %v448
  %1087 = vmatmul.mubr.f32.gmra.mxu0 %v263
  %v1088 = vpop.f32.mrf.mxu0
  %v1089 = vadd.f32 %v749, %v1088
  %v1090 = vpop.f32.mrf.mxu0
  %1091 = vmatprep.mubr.f32.mxu0 %v451
  %1092 = vmatmul.mubr.f32.gmra.mxu0 %v267
  %v1093 = vpop.f32.mrf.mxu0
  %v1094 = vadd.f32 %v754, %v1093
  %v1095 = vpop.f32.mrf.mxu0
  %1096 = vmatprep.mubr.f32.mxu0 %v454
  %1097 = vmatmul.mubr.f32.gmra.mxu0 %v271
  %v1098 = vpop.f32.mrf.mxu0
  %v1099 = vadd.f32 %v759, %v1098
  %v1100 = vpop.f32.mrf.mxu0
  %1101 = vmatprep.mubr.f32.mxu0 %v457
  %1102 = vmatmul.mubr.f32.gmra.mxu0 %v275
  %v1103 = vpop.f32.mrf.mxu0
  %v1104 = vadd.f32 %v764, %v1103
  %v1105 = vpop.f32.mrf.mxu0
  %1106 = vmatprep.mubr.f32.mxu0 %v460
  %1107 = vmatmul.mubr.f32.gmra.mxu0 %v279
  %v1108 = vpop.f32.mrf.mxu0
  %v1109 = vadd.f32 %v769, %v1108
  %v1110 = vpop.f32.mrf.mxu0
  %1111 = vmatprep.mubr.f32.mxu0 %v463
  %1112 = vmatmul.mubr.f32.gmra.mxu0 %v283
  %v1113 = vpop.f32.mrf.mxu0
  %v1114 = vadd.f32 %v774, %v1113
  %v1115 = vpop.f32.mrf.mxu0
  %1116 = vmatprep.mubr.f32.mxu0 %v466
  %1117 = vmatmul.mubr.f32.gmra.mxu0 %v287
  %v1118 = vpop.f32.mrf.mxu0
  %v1119 = vadd.f32 %v779, %v1118
  %v1120 = vpop.f32.mrf.mxu0
  %1121 = vmatprep.mubr.f32.mxu0 %v469
  %1122 = vmatmul.mubr.f32.gmra.mxu0 %v291
  %v1123 = vpop.f32.mrf.mxu0
  %v1124 = vadd.f32 %v784, %v1123
  %v1125 = vpop.f32.mrf.mxu0
  %1126 = vmatprep.mubr.f32.mxu0 %v472
  %1127 = vmatmul.mubr.f32.gmra.mxu0 %v295
  %v1128 = vpop.f32.mrf.mxu0
  %v1129 = vadd.f32 %v789, %v1128
  %v1130 = vpop.f32.mrf.mxu0
  %1131 = vmatprep.mubr.f32.mxu0 %v475
  %1132 = vmatmul.mubr.f32.gmra.mxu0 %v299
  %v1133 = vpop.f32.mrf.mxu0
  %v1134 = vadd.f32 %v794, %v1133
  %v1135 = vpop.f32.mrf.mxu0
  %1136 = vmatprep.mubr.f32.mxu0 %v478
  %1137 = vmatmul.mubr.f32.gmra.mxu0 %v303
  %v1138 = vpop.f32.mrf.mxu0
  %v1139 = vadd.f32 %v799, %v1138
  %v1140 = vpop.f32.mrf.mxu0
  %1141 = vmatprep.mubr.f32.mxu0 %v481
  %1142 = vmatmul.mubr.f32.gmra.mxu0 %v307
  %v1143 = vpop.f32.mrf.mxu0
  %v1144 = vadd.f32 %v804, %v1143
  %v1145 = vpop.f32.mrf.mxu0
  %1146 = vmatprep.mubr.f32.mxu0 %v484
  %1147 = vmatmul.mubr.f32.gmra.mxu0 %v311
  %v1148 = vpop.f32.mrf.mxu0
  %v1149 = vadd.f32 %v809, %v1148
  %v1150 = vpop.f32.mrf.mxu0
  %1151 = vmatprep.mubr.f32.mxu0 %v487
  %1152 = vmatmul.mubr.f32.gmra.mxu0 %v315
  %v1153 = vpop.f32.mrf.mxu0
  %v1154 = vadd.f32 %v814, %v1153
  %v1155 = vpop.f32.mrf.mxu0
  %1156 = vmatprep.mubr.f32.mxu0 %v490
  %1157 = vmatmul.mubr.f32.gmra.mxu0 %v319
  %v1158 = vpop.f32.mrf.mxu0
  %v1159 = vadd.f32 %v819, %v1158
  %v1160 = vpop.f32.mrf.mxu0
  %1161 = vmatprep.mubr.f32.mxu0 %v493
  %1162 = vmatmul.mubr.f32.gmra.mxu0 %v323
  %v1163 = vpop.f32.mrf.mxu0
  %v1164 = vadd.f32 %v824, %v1163
  %v1165 = vpop.f32.mrf.mxu0
  %1166 = vmatprep.mubr.f32.mxu0 %v496
  %1167 = vmatmul.mubr.f32.gmra.mxu0 %v327
  %v1168 = vpop.f32.mrf.mxu0
  %v1169 = vadd.f32 %v829, %v1168
  %v1170 = vpop.f32.mrf.mxu0
  %1171 = vmatprep.mubr.f32.mxu0 %v499
  %1172 = vmatmul.mubr.f32.gmra.mxu0 %v331
  %v1173 = vpop.f32.mrf.mxu0
  %v1174 = vadd.f32 %v834, %v1173
  %v1175 = vpop.f32.mrf.mxu0
  %1176 = vmatprep.mubr.f32.mxu0 %v502
  %1177 = vmatmul.mubr.f32.gmra.mxu0 %v335
  %v1178 = vpop.f32.mrf.mxu0
  %v1179 = vadd.f32 %v839, %v1178
  %v1180 = vpop.f32.mrf.mxu0
  %1181 = vmatprep.mubr.f32.mxu0 %v505
  %1182 = vmatmul.mubr.f32.gmra.mxu0 %v339
  %v1183 = vpop.f32.mrf.mxu0
  %v1184 = vadd.f32 %v844, %v1183
  %v1185 = vpop.f32.mrf.mxu0
  %1186 = vdwg.mxu0
  %vm1187 = vcmask 400384
  %1188 = vst.msk [vmem:[%s2] sm:$0xff] %vm1187, %v914
  %1189 = vst.msk [vmem:[%s2 + $0x8] sm:$0xff] %vm1187, %v919
  %1190 = vst.msk [vmem:[%s2 + $0x10] sm:$0xff] %vm1187, %v924
  %1191 = vst.msk [vmem:[%s2 + $0x18] sm:$0xff] %vm1187, %v929
  %1192 = vst.msk [vmem:[%s2 + $0x20] sm:$0xff] %vm1187, %v934
  %1193 = vst.msk [vmem:[%s2 + $0x28] sm:$0xff] %vm1187, %v939
  %1194 = vst.msk [vmem:[%s2 + $0x30] sm:$0xff] %vm1187, %v944
  %1195 = vst.msk [vmem:[%s2 + $0x38] sm:$0xff] %vm1187, %v949
  %1196 = vst.msk [vmem:[%s2 + $0x40] sm:$0xff] %vm1187, %v954
  %1197 = vst.msk [vmem:[%s2 + $0x48] sm:$0xff] %vm1187, %v959
  %1198 = vst.msk [vmem:[%s2 + $0x50] sm:$0xff] %vm1187, %v964
  %1199 = vst.msk [vmem:[%s2 + $0x58] sm:$0xff] %vm1187, %v969
  %1200 = vst.msk [vmem:[%s2 + $0x60] sm:$0xff] %vm1187, %v974
  %1201 = vst.msk [vmem:[%s2 + $0x68] sm:$0xff] %vm1187, %v979
  %1202 = vst.msk [vmem:[%s2 + $0x70] sm:$0xff] %vm1187, %v984
  %1203 = vst.msk [vmem:[%s2 + $0x78] sm:$0xff] %vm1187, %v989
  %1204 = vst.msk [vmem:[%s2 + $0x80] sm:$0xff] %vm1187, %v994
  %1205 = vst.msk [vmem:[%s2 + $0x88] sm:$0xff] %vm1187, %v999
  %1206 = vst.msk [vmem:[%s2 + $0x90] sm:$0xff] %vm1187, %v1004
  %1207 = vst.msk [vmem:[%s2 + $0x98] sm:$0xff] %vm1187, %v1009
  %1208 = vst.msk [vmem:[%s2 + $0xa0] sm:$0xff] %vm1187, %v1014
  %1209 = vst.msk [vmem:[%s2 + $0xa8] sm:$0xff] %vm1187, %v1019
  %1210 = vst.msk [vmem:[%s2 + $0xb0] sm:$0xff] %vm1187, %v1024
  %1211 = vst.msk [vmem:[%s2 + $0xb8] sm:$0xff] %vm1187, %v1029
  %1212 = vst.msk [vmem:[%s2 + $0xc0] sm:$0xff] %vm1187, %v1034
  %1213 = vst.msk [vmem:[%s2 + $0xc8] sm:$0xff] %vm1187, %v1039
  %1214 = vst.msk [vmem:[%s2 + $0xd0] sm:$0xff] %vm1187, %v1044
  %1215 = vst.msk [vmem:[%s2 + $0xd8] sm:$0xff] %vm1187, %v1049
  %1216 = vst.msk [vmem:[%s2 + $0xe0] sm:$0xff] %vm1187, %v1054
  %1217 = vst.msk [vmem:[%s2 + $0xe8] sm:$0xff] %vm1187, %v1059
  %1218 = vst.msk [vmem:[%s2 + $0xf0] sm:$0xff] %vm1187, %v1064
  %1219 = vst.msk [vmem:[%s2 + $0xf8] sm:$0xff] %vm1187, %v1069
  %1220 = vst.msk [vmem:[%s2 + $0x100] sm:$0xff] %vm1187, %v1074
  %1221 = vst.msk [vmem:[%s2 + $0x108] sm:$0xff] %vm1187, %v1079
  %1222 = vst.msk [vmem:[%s2 + $0x110] sm:$0xff] %vm1187, %v1084
  %1223 = vst.msk [vmem:[%s2 + $0x118] sm:$0xff] %vm1187, %v1089
  %1224 = vst.msk [vmem:[%s2 + $0x120] sm:$0xff] %vm1187, %v1094
  %1225 = vst.msk [vmem:[%s2 + $0x128] sm:$0xff] %vm1187, %v1099
  %1226 = vst.msk [vmem:[%s2 + $0x130] sm:$0xff] %vm1187, %v1104
  %1227 = vst.msk [vmem:[%s2 + $0x138] sm:$0xff] %vm1187, %v1109
  %1228 = vst.msk [vmem:[%s2 + $0x140] sm:$0xff] %vm1187, %v1114
  %1229 = vst.msk [vmem:[%s2 + $0x148] sm:$0xff] %vm1187, %v1119
  %1230 = vst.msk [vmem:[%s2 + $0x150] sm:$0xff] %vm1187, %v1124
  %1231 = vst.msk [vmem:[%s2 + $0x158] sm:$0xff] %vm1187, %v1129
  %1232 = vst.msk [vmem:[%s2 + $0x160] sm:$0xff] %vm1187, %v1134
  %1233 = vst.msk [vmem:[%s2 + $0x168] sm:$0xff] %vm1187, %v1139
  %1234 = vst.msk [vmem:[%s2 + $0x170] sm:$0xff] %vm1187, %v1144
  %1235 = vst.msk [vmem:[%s2 + $0x178] sm:$0xff] %vm1187, %v1149
  %1236 = vst.msk [vmem:[%s2 + $0x180] sm:$0xff] %vm1187, %v1154
  %1237 = vst.msk [vmem:[%s2 + $0x188] sm:$0xff] %vm1187, %v1159
  %1238 = vst.msk [vmem:[%s2 + $0x190] sm:$0xff] %vm1187, %v1164
  %1239 = vst.msk [vmem:[%s2 + $0x198] sm:$0xff] %vm1187, %v1169
  %1240 = vst.msk [vmem:[%s2 + $0x1a0] sm:$0xff] %vm1187, %v1174
  %1241 = vst.msk [vmem:[%s2 + $0x1a8] sm:$0xff] %vm1187, %v1179
  %1242 = vst.msk [vmem:[%s2 + $0x1b0] sm:$0xff] %vm1187, %v1184
  // Predicated region
  $region10: #{relu_conv2d_1x1.1} parent=0 // pred_check
    _
  $region11: #{relu_conv2d_1x1.1} parent=0 // pred_check_branch
    %1244 = sbr.rel (0) target = $region13
  $region12: #{relu_conv2d_1x1.1} parent=0 // pred_region
    _
  $region13: #{relu_conv2d_1x1.1} parent=0 // pred_fallthru
    _
  // Predicated region
  $region14: #{relu_conv2d_1x1.1} parent=0 // pred_check
    _
  $region15: #{relu_conv2d_1x1.1} parent=0 // pred_check_branch
    %1246 = sbr.rel (0) target = $region17
  $region16: #{relu_conv2d_1x1.1} parent=0 // pred_region
    _
  $region17: #{relu_conv2d_1x1.1} parent=0 // pred_fallthru
    _

</llo_original>
